<compile_context>
chip_gen: v6e
topology: v6e:2x2x1
jax: 0.10.0
libtpu: 0.0.40
codegen_flags: <defaults>
</compile_context>

<pallas_src>
import functools
from typing import NamedTuple

import jax
import jax.numpy as jnp
from jax.experimental import pallas as pl
from jax.experimental.pallas import tpu as pltpu


_INV_SQRT2 = 0.7071067811865476


def _round_up(v, m):
    return (v + m - 1) // m * m


# --------------------------------------------------------------------------- kernel
def _ffn_kernel(x_ref, w1_ref, b1_ref, w2_ref, b2_ref, o_ref,
                acc_ref, xbf_ref, *, approximate_gelu):
    hk = pl.program_id(1)
    last = pl.num_programs(1) - 1

    # Cast the row tile to bf16 once per row tile; it stays resident across hk.
    @pl.when(hk == 0)
    def _cast_x():
        xbf_ref[...] = x_ref[...].astype(jnp.bfloat16)

    # fc1 chunk: x @ W1[:, hk-block] + b1[hk-block]   (bf16 operands, f32 accumulate)
    h = jnp.dot(xbf_ref[...], w1_ref[...], preferred_element_type=jnp.float32)
    h = h + b1_ref[...]                                   # (tm, th) + (1, th)

    if approximate_gelu:
        # tanh GELU -> EUP slot (frees the VALU); opt-in, not nn.GELU()'s default.
        h = jax.nn.gelu(h, approximate=True)
    else:
        # exact erf GELU: matches nn.GELU() default semantics.
        h = 0.5 * h * (1.0 + jax.lax.erf(h * _INV_SQRT2))

    # Dropout(p) at inference / p == 0 is the identity.

    # fc2 partial sum: gelu(h_chunk) @ W2[hk-block, :], accumulated in f32.
    part = jnp.dot(h.astype(w2_ref.dtype), w2_ref[...],
                   preferred_element_type=jnp.float32)

    # First hidden chunk writes the accumulator directly (no zero-fill + add).
    @pl.when(hk == 0)
    def _write():
        acc_ref[...] = part

    @pl.when(hk != 0)
    def _accum():
        acc_ref[...] += part

    @pl.when(hk == last)
    def _finalize():
        o_ref[...] = (acc_ref[...] + b2_ref[...]).astype(o_ref.dtype)


# ------------------------------------------------------------------ chip / tile picks
def _chip_info():
    kind = ""
    try:
        kind = jax.devices()[0].device_kind.lower()
    except Exception:
        pass
    vmem_cap = None
    try:
        vmem_cap = int(pltpu.get_tpu_info().vmem_capacity_bytes)
    except Exception:
        vmem_cap = None
    if vmem_cap is None or vmem_cap <= 0:
        # v7x has 64 MiB / TensorCore; older generations 128 MiB.
        vmem_cap = (64 << 20) if "v7" in kind else (128 << 20)
    return kind, vmem_cap


def _pick_th(hid_128, target=512, max_th=2048):
    """Pick th as a 128-multiple divisor of round_up(hidden,128) nearest `target`.

    A true divisor means zero dead hidden columns -> no wasted hk step.
    """
    n = hid_128 // 128
    best = 128
    for d in range(1, n + 1):
        if n % d == 0:
            th = 128 * d
            if th <= max_th and abs(th - target) < abs(best - target):
                best = th
    return best


def _pick_tm(M, dim_p, th, out_p, x_bytes, out_bytes, kind, vmem_cap, tm_user):
    if tm_user is not None:
        tm = min(_round_up(tm_user, 8), _round_up(M, 8))
    else:
        if "v7" in kind:
            tm = 512          # HBM/MXU crossover ~310 FLOP/byte (3.2 TB/s HBM)
        elif "v6" in kind:
            tm = 768          # crossover ~640 FLOP/byte (918 TF/s vs ~1.4 TB/s)
        else:
            tm = 256          # v5e and unknown parts
        tm = min(tm, _round_up(M, 8))
        # v7x megacore: ensure >=2 row programs so both TensorCores get work.
        if "v7" in kind and M > 8 and _round_up(M, tm) // tm < 2:
            tm = max(8, _round_up(-(-M // 2), 8))

    def vmem_est(tm_):
        return (2 * tm_ * dim_p * x_bytes        # x row tile (input dtype, dbl-buffered)
                + tm_ * dim_p * 2                # bf16 x scratch
                + 2 * dim_p * th * 2             # W1 hidden chunk (bf16, dbl-buffered)
                + 2 * th * out_p * 2             # W2 hidden chunk
                + 2 * th * 4 + 2 * out_p * 4     # biases
                + 2 * tm_ * out_p * out_bytes    # output tile (dbl-buffered)
                + tm_ * out_p * 4                # f32 accumulator scratch
                + tm_ * th * 4)                  # f32 h intermediate between matmuls

    budget = int(0.72 * vmem_cap)
    while tm > 8 and vmem_est(tm) > budget:
        tm = max(8, _round_up(tm // 2, 8))
    return tm, vmem_est(tm)


# ------------------------------------------------------------------- params (prep once)
class FFNParams(NamedTuple):
    w1: jax.Array   # [dim_p, hid_p]  bf16
    b1: jax.Array   # [1, hid_p]      f32
    w2: jax.Array   # [hid_p, out_p]  bf16
    b2: jax.Array   # [1, out_p]      f32


def prepare_ffn_params(w1, b1, w2, b2, *, th=None):
    """Pad / cast the FFN weights once, outside the hot path.

    w1: [dim, hidden]   (x @ W layout, i.e. nn.Linear weight transposed)
    b1: [hidden]
    w2: [hidden, out_dim]
    b2: [out_dim]
    Returns (FFNParams, meta) where meta holds the static original sizes and th.
    """
    dim, hidden = w1.shape
    out_dim = w2.shape[1]
    dim_p = _round_up(dim, 128)
    out_p = _round_up(out_dim, 128)
    hid_128 = _round_up(hidden, 128)
    if th is None:
        th = _pick_th(hid_128)
    else:
        th = min(_round_up(th, 128), hid_128)
    hid_p = _round_up(hid_128, th)

    w1_p = jnp.pad(w1.astype(jnp.bfloat16), ((0, dim_p - dim), (0, hid_p - hidden)))
    w2_p = jnp.pad(w2.astype(jnp.bfloat16), ((0, hid_p - hidden), (0, out_p - out_dim)))
    b1_p = jnp.pad(b1.astype(jnp.float32), (0, hid_p - hidden)).reshape(1, hid_p)
    b2_p = jnp.pad(b2.astype(jnp.float32), (0, out_p - out_dim)).reshape(1, out_p)

    meta = dict(hidden=int(hidden), out_dim=int(out_dim), th=int(th))
    return FFNParams(w1_p, b1_p, w2_p, b2_p), meta


# ----------------------------------------------------------------------------- apply
@functools.partial(jax.jit,
                   static_argnames=("hidden", "out_dim", "th", "tm", "approximate_gelu"))
def feed_forward_prepared(x, params: FFNParams, *, hidden, out_dim, th,
                          tm=None, approximate_gelu=False):
    """FeedForward forward pass (eval / dropout-identity path) on prepared params."""
    lead = x.shape[:-1]
    dim = x.shape[-1]
    M = 1
    for s in lead:
        M *= int(s)

    dim_p = params.w1.shape[0]
    hid_p = params.w1.shape[1]
    out_p = params.w2.shape[1]
    assert hid_p % th == 0, "th must evenly divide the padded hidden dim"

    out_dtype = x.dtype
    x_bytes = jnp.dtype(x.dtype).itemsize
    out_bytes = jnp.dtype(out_dtype).itemsize

    kind, vmem_cap = _chip_info()
    tm_sel, vmem_est = _pick_tm(M, dim_p, th, out_p, x_bytes, out_bytes,
                                kind, vmem_cap, tm)
    m_p = _round_up(M, tm_sel)

    x2d = x.reshape(M, dim)
    if m_p != M or dim_p != dim:
        # Pad only when needed; dtype unchanged (bf16 cast happens in-kernel).
        x2d = jnp.pad(x2d, ((0, m_p - M), (0, dim_p - dim)))

    grid = (m_p // tm_sel, hid_p // th)
    n_row_tiles = grid[0]

    # VMEM limit: cover the estimated footprint with headroom, never exceed the chip.
    vmem_limit = int(min(0.9 * vmem_cap, max(32 << 20, vmem_est + (4 << 20))))

    flops = 2 * M * dim * hidden + 2 * M * hidden * out_dim
    transcendentals = (M * hidden) if approximate_gelu else 0
    bytes_accessed = (m_p * dim_p * x_bytes
                      + n_row_tiles * (dim_p * hid_p * 2 + hid_p * out_p * 2
                                       + hid_p * 4 + out_p * 4)
                      + m_p * out_p * out_bytes)

    kernel = functools.partial(_ffn_kernel, approximate_gelu=approximate_gelu)

    out2d = pl.pallas_call(
        kernel,
        out_shape=jax.ShapeDtypeStruct((m_p, out_p), out_dtype),
        grid_spec=pltpu.PrefetchScalarGridSpec(
            num_scalar_prefetch=0,
            grid=grid,
            in_specs=[
                pl.BlockSpec((tm_sel, dim_p), lambda i, hk: (i, 0)),   # x row tile
                pl.BlockSpec((dim_p, th), lambda i, hk: (0, hk)),      # W1 hidden chunk
                pl.BlockSpec((1, th), lambda i, hk: (0, hk)),          # b1 hidden chunk
                pl.BlockSpec((th, out_p), lambda i, hk: (hk, 0)),      # W2 hidden chunk
                pl.BlockSpec((1, out_p), lambda i, hk: (0, 0)),        # b2 (resident)
            ],
            out_specs=pl.BlockSpec((tm_sel, out_p), lambda i, hk: (i, 0)),
            scratch_shapes=[
                pltpu.VMEM((tm_sel, out_p), jnp.float32),    # f32 accumulator
                pltpu.VMEM((tm_sel, dim_p), jnp.bfloat16),   # bf16 x tile (cast once)
            ],
        ),
        compiler_params=pltpu.CompilerParams(
            dimension_semantics=("parallel", "arbitrary"),
            vmem_limit_bytes=vmem_limit,
        ),
        cost_estimate=pl.CostEstimate(
            flops=int(flops),
            transcendentals=int(transcendentals),
            bytes_accessed=int(bytes_accessed),
        ),
    )(x2d, params.w1, params.b1, params.w2, params.b2)

    return out2d[:M, :out_dim].reshape(*lead, out_dim)


def feed_forward(x, w1, b1, w2, b2, *, tm=None, th=None, approximate_gelu=False):
    """Convenience wrapper: prepares (pads/casts) weights and applies the kernel.

    For hot loops, call prepare_ffn_params once and feed_forward_prepared per step.
    """
    params, meta = prepare_ffn_params(w1, b1, w2, b2, th=th)
    return feed_forward_prepared(x, params, hidden=meta["hidden"],
                                 out_dim=meta["out_dim"], th=meta["th"],
                                 tm=tm, approximate_gelu=approximate_gelu)


# -------------------------------------------------------------------------- references
def _reference_bf16(x, w1, b1, w2, b2):
    """Reference with the same bf16-operand / f32-accumulate precision as the kernel."""
    B, N, dim = x.shape
    xb = x.reshape(-1, dim).astype(jnp.bfloat16)
    h = jnp.dot(xb, w1.astype(jnp.bfloat16),
                preferred_element_type=jnp.float32) + b1.astype(jnp.float32)
    h = 0.5 * h * (1.0 + jax.lax.erf(h * _INV_SQRT2))
    o = jnp.dot(h.astype(jnp.bfloat16), w2.astype(jnp.bfloat16),
                preferred_element_type=jnp.float32) + b2.astype(jnp.float32)
    return o.reshape(B, N, -1).astype(x.dtype)


def _reference_f32(x, w1, b1, w2, b2):
    """Full-precision module reference (fc1 -> GELU -> fc2)."""
    h = jnp.einsum("bnd,dh->bnh", x, w1) + b1
    h = 0.5 * h * (1.0 + jax.lax.erf(h * _INV_SQRT2))
    return jnp.einsum("bnh,ho->bno", h, w2) + b2


if __name__ == "__main__":
    # Small shapes consistent with the module: dim=32, hidden_dim=64, dropout=0.0
    B, N, dim, hidden = 2, 8, 32, 64
    out_dim = dim  # out_dim=None in __init__ -> out_dim = dim

    key = jax.random.PRNGKey(0)
    kx, k1, k2, k3, k4 = jax.random.split(key, 5)

    x = jax.random.normal(kx, (B, N, dim), dtype=jnp.float32)
    # nn.Linear(dim, hidden): weight [hidden, dim]; we store transposed [dim, hidden]
    w1 = jax.random.normal(k1, (dim, hidden), dtype=jnp.float32) * (1.0 / jnp.sqrt(dim))
    b1 = jax.random.normal(k2, (hidden,), dtype=jnp.float32) * 0.01
    w2 = jax.random.normal(k3, (hidden, out_dim), dtype=jnp.float32) * (1.0 / jnp.sqrt(hidden))
    b2 = jax.random.normal(k4, (out_dim,), dtype=jnp.float32) * 0.01

    # Prepare (pad/cast) the weights ONCE, then run the kernel on prepared params.
    params, meta = prepare_ffn_params(w1, b1, w2, b2)
    out = feed_forward_prepared(x, params, hidden=meta["hidden"],
                                out_dim=meta["out_dim"], th=meta["th"])
    out = jax.block_until_ready(out)
    assert out.shape == (B, N, out_dim)

    # Tight check vs a reference with matching (bf16 operand / f32 accumulate) precision.
    ref = _reference_bf16(x, w1, b1, w2, b2)
    assert jnp.allclose(out, ref, atol=2e-3, rtol=2e-3), "mismatch vs bf16-matched reference"

    # Loose sanity check vs the full-f32 module math (tolerance = bf16 operand rounding).
    ref32 = _reference_f32(x, w1, b1, w2, b2)
    assert jnp.allclose(out, ref32, atol=1e-1, rtol=1e-1), "mismatch vs f32 module reference"

    print("KERNEL_OK")
</pallas_src>

<mosaic_0001>
module attributes {stable_mosaic.version = 11 : i64} {
  func.func @_ffn_kernel(%arg0: i32, %arg1: i32, %arg2: memref<16x128xf32, #tpu.memory_space<vmem>>, %arg3: memref<128x128xbf16, #tpu.memory_space<vmem>>, %arg4: memref<1x128xf32, #tpu.memory_space<vmem>>, %arg5: memref<128x128xbf16, #tpu.memory_space<vmem>>, %arg6: memref<1x128xf32, #tpu.memory_space<vmem>>, %arg7: memref<16x128xf32, #tpu.memory_space<vmem>>, %arg8: memref<16x128xf32, #tpu.memory_space<vmem>>, %arg9: memref<16x128xbf16, #tpu.memory_space<vmem>>) attributes {dimension_semantics = [#tpu.dimension_semantics<parallel>, #tpu.dimension_semantics<arbitrary>], iteration_bounds = array<i64: 1, 1>, scalar_prefetch = 0 : i64, scratch_operands = 2 : i64, tpu.core_type = #tpu.core_type<tc>, window_params = [{transform_indices = @transform_0, window_bounds = array<i64: 16, 128>}, {transform_indices = @transform_1, window_bounds = array<i64: 128, 128>}, {transform_indices = @transform_2, window_bounds = array<i64: 1, 128>}, {transform_indices = @transform_3, window_bounds = array<i64: 128, 128>}, {pipeline_mode = #tpu.pipeline_mode<synchronous>, transform_indices = @transform_4, window_bounds = array<i64: 1, 128>}, {transform_indices = @transform_5, window_bounds = array<i64: 16, 128>}]} {
    %c0_i32 = arith.constant 0 : i32
    %0 = arith.cmpi eq, %arg1, %c0_i32 : i32
    %1 = arith.extui %0 : i1 to i32
    %c0_i32_0 = arith.constant 0 : i32
    %2 = arith.cmpi ne, %1, %c0_i32_0 : i32
    scf.if %2 {
      %c0_18 = arith.constant 0 : index
      %c0_19 = arith.constant 0 : index
      %29 = vector.load %arg2[%c0_18, %c0_19] : memref<16x128xf32, #tpu.memory_space<vmem>>, vector<16x128xf32>
      %30 = arith.truncf %29 : vector<16x128xf32> to vector<16x128xbf16>
      %c0_20 = arith.constant 0 : index
      %c0_21 = arith.constant 0 : index
      %31 = vector.load %arg9[%c0_20, %c0_21] : memref<16x128xbf16, #tpu.memory_space<vmem>>, vector<16x128xbf16>
      tpu.vector_store %arg9[%c0_20, %c0_21], %30 {strides = array<i32>} : memref<16x128xbf16, #tpu.memory_space<vmem>>, vector<16x128xbf16>,
    } else {
    }
    %c0 = arith.constant 0 : index
    %c0_1 = arith.constant 0 : index
    %3 = vector.load %arg9[%c0, %c0_1] : memref<16x128xbf16, #tpu.memory_space<vmem>>, vector<16x128xbf16>
    %c0_2 = arith.constant 0 : index
    %c0_3 = arith.constant 0 : index
    %4 = vector.load %arg3[%c0_2, %c0_3] : memref<128x128xbf16, #tpu.memory_space<vmem>>, vector<128x128xbf16>
    %cst = arith.constant dense<0.000000e+00> : vector<16x128xf32>
    %5 = tpu.matmul %3, %4, %cst {dimension_numbers = #tpu.dot_dimension_numbers<[1], [0], [0], [1], [0, 0, 1, 1], [], []>} : vector<16x128xbf16>, vector<128x128xbf16>, vector<16x128xf32> -> vector<16x128xf32>
    %c0_4 = arith.constant 0 : index
    %c0_5 = arith.constant 0 : index
    %6 = vector.load %arg4[%c0_4, %c0_5] : memref<1x128xf32, #tpu.memory_space<vmem>>, vector<1x128xf32>
    %7 = vector.broadcast %6 : vector<1x128xf32> to vector<16x128xf32>
    %8 = arith.addf %5, %7 : vector<16x128xf32>
    %cst_6 = arith.constant 5.000000e-01 : f32
    %9 = vector.broadcast %cst_6 : f32 to vector<16x128xf32>
    %10 = arith.mulf %9, %8 : vector<16x128xf32>
    %cst_7 = arith.constant 0.707106769 : f32
    %11 = vector.broadcast %cst_7 : f32 to vector<16x128xf32>
    %12 = arith.mulf %8, %11 : vector<16x128xf32>
    %13 = math.erf %12 : vector<16x128xf32>
    %cst_8 = arith.constant 1.000000e+00 : f32
    %14 = vector.broadcast %cst_8 : f32 to vector<16x128xf32>
    %15 = arith.addf %14, %13 : vector<16x128xf32>
    %16 = arith.mulf %10, %15 : vector<16x128xf32>
    %17 = arith.truncf %16 : vector<16x128xf32> to vector<16x128xbf16>
    %c0_9 = arith.constant 0 : index
    %c0_10 = arith.constant 0 : index
    %18 = vector.load %arg5[%c0_9, %c0_10] : memref<128x128xbf16, #tpu.memory_space<vmem>>, vector<128x128xbf16>
    %cst_11 = arith.constant dense<0.000000e+00> : vector<16x128xf32>
    %19 = tpu.matmul %17, %18, %cst_11 {dimension_numbers = #tpu.dot_dimension_numbers<[1], [0], [0], [1], [0, 0, 1, 1], [], []>} : vector<16x128xbf16>, vector<128x128xbf16>, vector<16x128xf32> -> vector<16x128xf32>
    %c0_i32_12 = arith.constant 0 : i32
    %20 = arith.cmpi eq, %arg1, %c0_i32_12 : i32
    %21 = arith.extui %20 : i1 to i32
    %c0_i32_13 = arith.constant 0 : i32
    %22 = arith.cmpi ne, %21, %c0_i32_13 : i32
    scf.if %22 {
      %c0_18 = arith.constant 0 : index
      %c0_19 = arith.constant 0 : index
      %29 = vector.load %arg8[%c0_18, %c0_19] : memref<16x128xf32, #tpu.memory_space<vmem>>, vector<16x128xf32>
      tpu.vector_store %arg8[%c0_18, %c0_19], %19 {strides = array<i32>} : memref<16x128xf32, #tpu.memory_space<vmem>>, vector<16x128xf32>,
    } else {
    }
    %c0_i32_14 = arith.constant 0 : i32
    %23 = arith.cmpi ne, %arg1, %c0_i32_14 : i32
    %24 = arith.extui %23 : i1 to i32
    %c0_i32_15 = arith.constant 0 : i32
    %25 = arith.cmpi ne, %24, %c0_i32_15 : i32
    scf.if %25 {
      %c0_18 = arith.constant 0 : index
      %c0_19 = arith.constant 0 : index
      %29 = vector.load %arg8[%c0_18, %c0_19] : memref<16x128xf32, #tpu.memory_space<vmem>>, vector<16x128xf32>
      %30 = arith.addf %29, %19 : vector<16x128xf32>
      %c0_20 = arith.constant 0 : index
      %c0_21 = arith.constant 0 : index
      %31 = vector.load %arg8[%c0_20, %c0_21] : memref<16x128xf32, #tpu.memory_space<vmem>>, vector<16x128xf32>
      tpu.vector_store %arg8[%c0_20, %c0_21], %30 {strides = array<i32>} : memref<16x128xf32, #tpu.memory_space<vmem>>, vector<16x128xf32>,
    } else {
    }
    %c0_i32_16 = arith.constant 0 : i32
    %26 = arith.cmpi eq, %arg1, %c0_i32_16 : i32
    %27 = arith.extui %26 : i1 to i32
    %c0_i32_17 = arith.constant 0 : i32
    %28 = arith.cmpi ne, %27, %c0_i32_17 : i32
    scf.if %28 {
      %c0_18 = arith.constant 0 : index
      %c0_19 = arith.constant 0 : index
      %29 = vector.load %arg8[%c0_18, %c0_19] : memref<16x128xf32, #tpu.memory_space<vmem>>, vector<16x128xf32>
      %c0_20 = arith.constant 0 : index
      %c0_21 = arith.constant 0 : index
      %30 = vector.load %arg6[%c0_20, %c0_21] : memref<1x128xf32, #tpu.memory_space<vmem>>, vector<1x128xf32>
      %31 = vector.broadcast %30 : vector<1x128xf32> to vector<16x128xf32>
      %32 = arith.addf %29, %31 : vector<16x128xf32>
      %c0_22 = arith.constant 0 : index
      %c0_23 = arith.constant 0 : index
      %33 = vector.load %arg7[%c0_22, %c0_23] : memref<16x128xf32, #tpu.memory_space<vmem>>, vector<16x128xf32>
      tpu.vector_store %arg7[%c0_22, %c0_23], %32 {strides = array<i32>} : memref<16x128xf32, #tpu.memory_space<vmem>>, vector<16x128xf32>,
    } else {
    }
    return
  }
  func.func @transform_0(%arg0: i32, %arg1: i32) -> (i32, i32) {
    %c0_i32 = arith.constant 0 : i32
    %c0_i32_0 = arith.constant 0 : i32
    return %arg0, %c0_i32 : i32, i32
  }
  func.func @transform_1(%arg0: i32, %arg1: i32) -> (i32, i32) {
    %c0_i32 = arith.constant 0 : i32
    %c0_i32_0 = arith.constant 0 : i32
    return %c0_i32, %arg1 : i32, i32
  }
  func.func @transform_2(%arg0: i32, %arg1: i32) -> (i32, i32) {
    %c0_i32 = arith.constant 0 : i32
    %c0_i32_0 = arith.constant 0 : i32
    return %c0_i32, %arg1 : i32, i32
  }
  func.func @transform_3(%arg0: i32, %arg1: i32) -> (i32, i32) {
    %c0_i32 = arith.constant 0 : i32
    %c0_i32_0 = arith.constant 0 : i32
    return %arg1, %c0_i32 : i32, i32
  }
  func.func @transform_4(%arg0: i32, %arg1: i32) -> (i32, i32) {
    %c0_i32 = arith.constant 0 : i32
    %c0_i32_0 = arith.constant 0 : i32
    %c0_i32_1 = arith.constant 0 : i32
    return %c0_i32, %c0_i32_0 : i32, i32
  }
  func.func @transform_5(%arg0: i32, %arg1: i32) -> (i32, i32) {
    %c0_i32 = arith.constant 0 : i32
    %c0_i32_0 = arith.constant 0 : i32
    return %arg0, %c0_i32 : i32, i32
  }
}

</mosaic_0001>

<llo_original>
// kernel: feed_forward_prepared.1
$region0: #{feed_forward_prepared.1}
  #allocation0 [shape = 'u32[]', space=smem, size = 0x4, offset = 0x4, fixed_abs, tag = 'smem constant byte address 0x4 - core index']
  #allocation1 [shape = 'u32[144,128]{1,0:T(1,128)}', space=vmem, size = 0x12000, scoped, tag = 'internal scratch']
  #allocation2 [shape = 'f32[16,128]{1,0:T(8,128)}', space=vmem, size = 0x2000, scoped, tag = 'scratch operand']
  #allocation3 [shape = 'bf16[16,128]{1,0:T(8,128)(2,1)}', space=vmem, size = 0x1000, scoped, tag = 'scratch operand']
  %s0 = inlined_call_operand.vmem [shape: f32[16,128], index: 0, kind: input, shape index: {}]
  %s1 = inlined_call_operand.hbm [shape: bf16[128,128], index: 1, kind: input, shape index: {}]
  %s2 = inlined_call_operand.vmem [shape: f32[1,128], index: 2, kind: input, shape index: {}]
  %s3 = inlined_call_operand.hbm [shape: bf16[128,128], index: 3, kind: input, shape index: {}]
  %s4 = inlined_call_operand.vmem [shape: f32[1,128], index: 4, kind: input, shape index: {}]
  %s5 = inlined_call_operand.vmem [shape: f32[16,128], index: 5, kind: output, shape index: {}]
  %s6 = sld [smem:[#allocation0]]
  $region54: #{feed_forward_prepared.1} parent=0
    _
  %s8 = ssub.s32 1, %s6
  %s9 = scalar_select 0, %s8, %s6
  $region1: #{feed_forward_prepared.1} parent=0
    #allocation4 [shape = 'u8[32768]{0}', space=vmem, size = 0x8000, scoped, tag = 'input window, operand 1, single buffered']
    #allocation5 [shape = 's32[1]{0}', space=sflag, size = 0x4, scoped, tag = 'scoped memory for feed_forward_prepared.1']
    #allocation6 [shape = 'u8[32768]{0}', space=vmem, size = 0x8000, scoped, tag = 'input window, operand 3, single buffered']
    #allocation7 [shape = 's32[1]{0}', space=sflag, size = 0x4, scoped, tag = 'scoped memory for feed_forward_prepared.1']
    %10 = vsyncpa [#allocation5], 0
    %11 = vsyncpa [#allocation7], 0
    // Predicated region
    $region2: #{feed_forward_prepared.1} parent=1 // pred_check
      _
    $region3: #{feed_forward_prepared.1} parent=1 // pred_check_branch
      %13 = sbr.rel (0) target = $region5
    $region4: #{feed_forward_prepared.1} parent=1 // pred_region
      _
    $region5: #{feed_forward_prepared.1} parent=1 // pred_fallthru
      _
    // Predicated region
    $region6: #{feed_forward_prepared.1} parent=1 // pred_check
      _
    $region7: #{feed_forward_prepared.1} parent=1 // pred_check_branch
      %15 = sbr.rel (0) target = $region9
    $region8: #{feed_forward_prepared.1} parent=1 // pred_region
      %s17 = ssub.s32 1024, 1024
      %18 = vsyncadd [#allocation5], %s17
      %s19 = sshll.u32 [#allocation4], 4
      %s20 = int_to_ptr.vmem [resolvable:$true] %s19
      %25 = dma.hbm_to_vmem [thread:$0]  %s1, 1024, %s20, [#allocation5], 64, 64, 4
    $region9: #{feed_forward_prepared.1} parent=1 // pred_fallthru
      _
    // Predicated region
    $region10: #{feed_forward_prepared.1} parent=1 // pred_check
      _
    $region11: #{feed_forward_prepared.1} parent=1 // pred_check_branch
      %27 = sbr.rel (0) target = $region13
    $region12: #{feed_forward_prepared.1} parent=1 // pred_region
      _
    $region13: #{feed_forward_prepared.1} parent=1 // pred_fallthru
      _
    // Predicated region
    $region14: #{feed_forward_prepared.1} parent=1 // pred_check
      _
    $region15: #{feed_forward_prepared.1} parent=1 // pred_check_branch
      %29 = sbr.rel (0) target = $region17
    $region16: #{feed_forward_prepared.1} parent=1 // pred_region
      %s31 = ssub.s32 1024, 1024
      %32 = vsyncadd [#allocation7], %s31
      %s33 = sshll.u32 [#allocation6], 4
      %s34 = int_to_ptr.vmem [resolvable:$true] %s33
      %39 = dma.hbm_to_vmem [thread:$0]  %s3, 1024, %s34, [#allocation7], 64, 64, 4
    $region17: #{feed_forward_prepared.1} parent=1 // pred_fallthru
      _
    // Predicated region
    $region18: #{feed_forward_prepared.1} parent=1 // pred_check
      _
    $region19: #{feed_forward_prepared.1} parent=1 // pred_check_branch
      %41 = sbr.rel (0) target = $region21
    $region20: #{feed_forward_prepared.1} parent=1 // pred_region
      _
    $region21: #{feed_forward_prepared.1} parent=1 // pred_fallthru
      _
    // Predicated region
    $region22: #{feed_forward_prepared.1} parent=1 // pred_check
      _
    $region23: #{feed_forward_prepared.1} parent=1 // pred_check_branch
      %43 = sbr.rel (0) target = $region25
    $region24: #{feed_forward_prepared.1} parent=1 // pred_region
      %44 = dma.done [#allocation5], 1024
    $region25: #{feed_forward_prepared.1} parent=1 // pred_fallthru
      _
    // Predicated region
    $region26: #{feed_forward_prepared.1} parent=1 // pred_check
      _
    $region27: #{feed_forward_prepared.1} parent=1 // pred_check_branch
      %46 = sbr.rel (0) target = $region29
    $region28: #{feed_forward_prepared.1} parent=1 // pred_region
      %47 = dma.done [#allocation7], 1024
    $region29: #{feed_forward_prepared.1} parent=1 // pred_fallthru
      _
    %p49 = scmp.eq.s32.totalorder 0, 0
    // Predicated region
    $region30: #{feed_forward_prepared.1} parent=1 // pred_check
      %p50 = pneg %p49
    $region31: #{feed_forward_prepared.1} parent=1 // pred_check_branch
      %52 = sbr.rel (%p50) target = $region33
    $region32: #{feed_forward_prepared.1} parent=1 // pred_region
      %v53 = vld [vmem:[%s0] sm:$0xff]
      %v54 = vld [vmem:[%s0 + $0x8] sm:$0xff]
      %v55 = vpack.c.bf16 %v54, %v53
      %v57 = vunpack.c.l.b16 %v55
      %v58 = vunpack.c.h.b16 %v55
      %v59 = vpack.c.b16 %v57, %v57
      %v60 = vpack.c.b16 %v58, %v58
      %63 = vst [vmem:[#allocation3] sm:$0xf] %v59
      %64 = vst [vmem:[#allocation3 + $0x4] sm:$0xf] %v60
    $region33: #{feed_forward_prepared.1} parent=1 // pred_fallthru
      _
    %v65 = vld [vmem:[#allocation3] sm:$0xf]
    %v66 = vld [vmem:[#allocation3 + $0x4] sm:$0xf]
    %v67 = vld [vmem:[#allocation4] sm:$0xf]
    %v68 = vld [vmem:[#allocation4 + $0x4] sm:$0xf]
    %v69 = vld [vmem:[#allocation4 + $0x8] sm:$0xf]
    %v70 = vld [vmem:[#allocation4 + $0xc] sm:$0xf]
    %v71 = vld [vmem:[#allocation4 + $0x10] sm:$0xf]
    %v72 = vld [vmem:[#allocation4 + $0x14] sm:$0xf]
    %v73 = vld [vmem:[#allocation4 + $0x18] sm:$0xf]
    %v74 = vld [vmem:[#allocation4 + $0x1c] sm:$0xf]
    %v75 = vld [vmem:[#allocation4 + $0x20] sm:$0xf]
    %v76 = vld [vmem:[#allocation4 + $0x24] sm:$0xf]
    %v77 = vld [vmem:[#allocation4 + $0x28] sm:$0xf]
    %v78 = vld [vmem:[#allocation4 + $0x2c] sm:$0xf]
    %v79 = vld [vmem:[#allocation4 + $0x30] sm:$0xf]
    %v80 = vld [vmem:[#allocation4 + $0x34] sm:$0xf]
    %v81 = vld [vmem:[#allocation4 + $0x38] sm:$0xf]
    %v82 = vld [vmem:[#allocation4 + $0x3c] sm:$0xf]
    %v83 = vld [vmem:[%s2] sm:$0x1]
    %v85 = vlaneseq
    %v86 = vshrl.u32 %v85, 7
    %v87 = vsub.s32 0, %v86
    %v88 = vrot.slane %v83, %v87
    %v92 = vunpack.c.l.b16 %v65
    %v93 = vunpack.c.l.b16 %v66
    %v94 = vpack.c.b16 %v93, %v92
    %v112 = vunpack.c.l.b16 %v67
    %v113 = vunpack.c.l.b16 %v68
    %v114 = vunpack.c.l.b16 %v69
    %v115 = vunpack.c.l.b16 %v70
    %v116 = vunpack.c.l.b16 %v71
    %v117 = vunpack.c.l.b16 %v72
    %v118 = vunpack.c.l.b16 %v73
    %v119 = vunpack.c.l.b16 %v74
    %v120 = vunpack.c.l.b16 %v75
    %v121 = vunpack.c.l.b16 %v76
    %v122 = vunpack.c.l.b16 %v77
    %v123 = vunpack.c.l.b16 %v78
    %v124 = vunpack.c.l.b16 %v79
    %v125 = vunpack.c.l.b16 %v80
    %v126 = vunpack.c.l.b16 %v81
    %v127 = vunpack.c.l.b16 %v82
    %v128 = vpack.c.b16 %v113, %v112
    %v129 = vpack.c.b16 %v115, %v114
    %v130 = vpack.c.b16 %v117, %v116
    %v131 = vpack.c.b16 %v119, %v118
    %v132 = vpack.c.b16 %v121, %v120
    %v133 = vpack.c.b16 %v123, %v122
    %v134 = vpack.c.b16 %v125, %v124
    %v135 = vpack.c.b16 %v127, %v126
    %144 = vmatprep.subr.bf16.mxu0 0
    %145 = vmatpush1.bf16.msra.mxu0 %v135
    %146 = vmatprep.subr.bf16.mxu0 0
    %147 = vmatpush1.bf16.msra.mxu0 %v134
    %148 = vmatprep.subr.bf16.mxu0 0
    %149 = vmatpush1.bf16.msra.mxu0 %v133
    %150 = vmatprep.subr.bf16.mxu0 0
    %151 = vmatpush1.bf16.msra.mxu0 %v132
    %152 = vmatprep.subr.bf16.mxu0 0
    %153 = vmatpush1.bf16.msra.mxu0 %v131
    %154 = vmatprep.subr.bf16.mxu0 0
    %155 = vmatpush1.bf16.msra.mxu0 %v130
    %156 = vmatprep.subr.bf16.mxu0 0
    %157 = vmatpush1.bf16.msra.mxu0 %v129
    %158 = vmatprep.subr.bf16.mxu0 0
    %159 = vmatpush1.bf16.msra.mxu0 %v128
    %160 = vmatprep.subr.bf16.mxu0 0
    %161 = vmatpush2.bf16.msra.mxu0 0
    %162 = vmatprep.subr.bf16.mxu0 0
    %163 = vmatpush2.bf16.msra.mxu0 0
    %164 = vmatprep.subr.bf16.mxu0 0
    %165 = vmatpush2.bf16.msra.mxu0 0
    %166 = vmatprep.subr.bf16.mxu0 0
    %167 = vmatpush2.bf16.msra.mxu0 0
    %168 = vmatprep.subr.bf16.mxu0 0
    %169 = vmatpush2.bf16.msra.mxu0 0
    %170 = vmatprep.subr.bf16.mxu0 0
    %171 = vmatpush2.bf16.msra.mxu0 0
    %172 = vmatprep.subr.bf16.mxu0 0
    %173 = vmatpush2.bf16.msra.mxu0 0
    %174 = vmatprep.subr.bf16.mxu0 0
    %175 = vmatpush2.bf16.msra.mxu0 0
    %176 = vmatprep.mubr.bf16.mxu0 0
    %177 = vmatmul.mubr.bf16.gmra.mxu0 %v94
    %v178 = vpop.f32.mrf.mxu0
    %v179 = vadd.f32 %v88, %v178
    %v180 = vpop.f32.mrf.mxu0
    %v181 = vpop.f32.mrf.mxu0
    %v182 = vadd.f32 %v88, %v181
    %v183 = vpop.f32.mrf.mxu0
    %184 = vdwg.mxu0
    %v185 = vmul.f32 %v179, 0.5
    %v186 = vmul.f32 %v182, 0.5
    %v187 = vmul.f32 %v179, 0.70710677
    %v188 = vmul.f32 %v182, 0.70710677
    %v189 = verf.f32.pop %v187
    %v190 = verf.f32.pop %v188
    %v191 = vadd.f32 %v189, 1.0
    %v192 = vadd.f32 %v190, 1.0
    %v193 = vmul.f32 %v185, %v191
    %v194 = vmul.f32 %v186, %v192
    %v195 = vpack.c.bf16 %v194, %v193
    %v196 = vld [vmem:[#allocation6] sm:$0xf]
    %v197 = vld [vmem:[#allocation6 + $0x4] sm:$0xf]
    %v198 = vld [vmem:[#allocation6 + $0x8] sm:$0xf]
    %v199 = vld [vmem:[#allocation6 + $0xc] sm:$0xf]
    %v200 = vld [vmem:[#allocation6 + $0x10] sm:$0xf]
    %v201 = vld [vmem:[#allocation6 + $0x14] sm:$0xf]
    %v202 = vld [vmem:[#allocation6 + $0x18] sm:$0xf]
    %v203 = vld [vmem:[#allocation6 + $0x1c] sm:$0xf]
    %v204 = vld [vmem:[#allocation6 + $0x20] sm:$0xf]
    %v205 = vld [vmem:[#allocation6 + $0x24] sm:$0xf]
    %v206 = vld [vmem:[#allocation6 + $0x28] sm:$0xf]
    %v207 = vld [vmem:[#allocation6 + $0x2c] sm:$0xf]
    %v208 = vld [vmem:[#allocation6 + $0x30] sm:$0xf]
    %v209 = vld [vmem:[#allocation6 + $0x34] sm:$0xf]
    %v210 = vld [vmem:[#allocation6 + $0x38] sm:$0xf]
    %v211 = vld [vmem:[#allocation6 + $0x3c] sm:$0xf]
    %v228 = vunpack.c.l.b16 %v196
    %v229 = vunpack.c.l.b16 %v197
    %v230 = vunpack.c.l.b16 %v198
    %v231 = vunpack.c.l.b16 %v199
    %v232 = vunpack.c.l.b16 %v200
    %v233 = vunpack.c.l.b16 %v201
    %v234 = vunpack.c.l.b16 %v202
    %v235 = vunpack.c.l.b16 %v203
    %v236 = vunpack.c.l.b16 %v204
    %v237 = vunpack.c.l.b16 %v205
    %v238 = vunpack.c.l.b16 %v206
    %v239 = vunpack.c.l.b16 %v207
    %v240 = vunpack.c.l.b16 %v208
    %v241 = vunpack.c.l.b16 %v209
    %v242 = vunpack.c.l.b16 %v210
    %v243 = vunpack.c.l.b16 %v211
    %v244 = vpack.c.b16 %v229, %v228
    %v245 = vpack.c.b16 %v231, %v230
    %v246 = vpack.c.b16 %v233, %v232
    %v247 = vpack.c.b16 %v235, %v234
    %v248 = vpack.c.b16 %v237, %v236
    %v249 = vpack.c.b16 %v239, %v238
    %v250 = vpack.c.b16 %v241, %v240
    %v251 = vpack.c.b16 %v243, %v242
    %260 = vmatprep.subr.bf16.mxu0 0
    %261 = vmatpush1.bf16.msra.mxu0 %v251
    %262 = vmatprep.subr.bf16.mxu0 0
    %263 = vmatpush1.bf16.msra.mxu0 %v250
    %264 = vmatprep.subr.bf16.mxu0 0
    %265 = vmatpush1.bf16.msra.mxu0 %v249
    %266 = vmatprep.subr.bf16.mxu0 0
    %267 = vmatpush1.bf16.msra.mxu0 %v248
    %268 = vmatprep.subr.bf16.mxu0 0
    %269 = vmatpush1.bf16.msra.mxu0 %v247
    %270 = vmatprep.subr.bf16.mxu0 0
    %271 = vmatpush1.bf16.msra.mxu0 %v246
    %272 = vmatprep.subr.bf16.mxu0 0
    %273 = vmatpush1.bf16.msra.mxu0 %v245
    %274 = vmatprep.subr.bf16.mxu0 0
    %275 = vmatpush1.bf16.msra.mxu0 %v244
    %276 = vmatprep.subr.bf16.mxu0 0
    %277 = vmatpush2.bf16.msra.mxu0 0
    %278 = vmatprep.subr.bf16.mxu0 0
    %279 = vmatpush2.bf16.msra.mxu0 0
    %280 = vmatprep.subr.bf16.mxu0 0
    %281 = vmatpush2.bf16.msra.mxu0 0
    %282 = vmatprep.subr.bf16.mxu0 0
    %283 = vmatpush2.bf16.msra.mxu0 0
    %284 = vmatprep.subr.bf16.mxu0 0
    %285 = vmatpush2.bf16.msra.mxu0 0
    %286 = vmatprep.subr.bf16.mxu0 0
    %287 = vmatpush2.bf16.msra.mxu0 0
    %288 = vmatprep.subr.bf16.mxu0 0
    %289 = vmatpush2.bf16.msra.mxu0 0
    %290 = vmatprep.subr.bf16.mxu0 0
    %291 = vmatpush2.bf16.msra.mxu0 0
    %292 = vmatprep.mubr.bf16.mxu0 0
    %293 = vmatmul.mubr.bf16.gmra.mxu0 %v195
    %v294 = vpop.f32.mrf.mxu0
    %v295 = vadd.f32 0.0, %v294
    %v296 = vpop.f32.mrf.mxu0
    %v297 = vpop.f32.mrf.mxu0
    %v298 = vadd.f32 0.0, %v297
    %v299 = vpop.f32.mrf.mxu0
    %300 = vdwg.mxu0
    // Predicated region
    $region34: #{feed_forward_prepared.1} parent=1 // pred_check
      %p301 = pneg %p49
    $region35: #{feed_forward_prepared.1} parent=1 // pred_check_branch
      %303 = sbr.rel (%p301) target = $region37
    $region36: #{feed_forward_prepared.1} parent=1 // pred_region
      %304 = vst [vmem:[#allocation2] sm:$0xff] %v295
      %305 = vst [vmem:[#allocation2 + $0x8] sm:$0xff] %v298
    $region37: #{feed_forward_prepared.1} parent=1 // pred_fallthru
      _
    %p306 = scmp.ne.s32.totalorder 0, 0
    // Predicated region
    $region38: #{feed_forward_prepared.1} parent=1 // pred_check
      %p307 = pneg %p306
    $region39: #{feed_forward_prepared.1} parent=1 // pred_check_branch
      %309 = sbr.rel (%p307) target = $region41
    $region40: #{feed_forward_prepared.1} parent=1 // pred_region
      %v310 = vld [vmem:[#allocation2] sm:$0xff]
      %v311 = vld [vmem:[#allocation2 + $0x8] sm:$0xff]
      %v312 = vadd.f32 %v310, %v295
      %v313 = vadd.f32 %v311, %v298
      %314 = vst [vmem:[#allocation2] sm:$0xff] %v312
      %315 = vst [vmem:[#allocation2 + $0x8] sm:$0xff] %v313
    $region41: #{feed_forward_prepared.1} parent=1 // pred_fallthru
      _
    // Predicated region
    $region42: #{feed_forward_prepared.1} parent=1 // pred_check
      %p316 = pneg %p49
    $region43: #{feed_forward_prepared.1} parent=1 // pred_check_branch
      %318 = sbr.rel (%p316) target = $region45
    $region44: #{feed_forward_prepared.1} parent=1 // pred_region
      %v319 = vld [vmem:[#allocation2] sm:$0xff]
      %v320 = vld [vmem:[#allocation2 + $0x8] sm:$0xff]
      %v321 = vld [vmem:[%s4] sm:$0x1]
      %v323 = vlaneseq
      %v324 = vshrl.u32 %v323, 7
      %v325 = vsub.s32 0, %v324
      %v326 = vrot.slane %v321, %v325
      %v328 = vadd.f32 %v319, %v326
      %v329 = vadd.f32 %v320, %v326
      %330 = vst [vmem:[%s5] sm:$0xff] %v328
      %331 = vst [vmem:[%s5 + $0x8] sm:$0xff] %v329
    $region45: #{feed_forward_prepared.1} parent=1 // pred_fallthru
      _
    // Predicated region
    $region46: #{feed_forward_prepared.1} parent=1 // pred_check
      _
    $region47: #{feed_forward_prepared.1} parent=1 // pred_check_branch
      %333 = sbr.rel (0) target = $region49
    $region48: #{feed_forward_prepared.1} parent=1 // pred_region
      _
    $region49: #{feed_forward_prepared.1} parent=1 // pred_fallthru
      _
    // Predicated region
    $region50: #{feed_forward_prepared.1} parent=1 // pred_check
      _
    $region51: #{feed_forward_prepared.1} parent=1 // pred_check_branch
      %335 = sbr.rel (0) target = $region53
    $region52: #{feed_forward_prepared.1} parent=1 // pred_region
      _
    $region53: #{feed_forward_prepared.1} parent=1 // pred_fallthru
      _
    %336 = vsyncpa [#allocation5], 1
    %337 = vsyncpa [#allocation7], 1

</llo_original>
